<compile_context>
chip_gen: v5e
topology: v5e:2x2
jax: 0.10.0
libtpu: 0.0.40
codegen_flags: <defaults>
</compile_context>

<pallas_src>
import functools

import jax
import jax.numpy as jnp
import numpy as np
from jax.experimental import pallas as pl
from jax.experimental.pallas import tpu as pltpu

RMS_EPS = 1e-4          # RunningMeanStd(epsilon=1e-4)
LN_EPS = 1e-5           # torch.nn.LayerNorm default eps
LANE = 128              # TPU lane width; every feature dim is padded to this
N_VEC_ROWS = 10         # packed vector rows per skipper (3 LN pairs + 4 biases)
N_W_BLOCKS = 4          # packed 128x128 weight blocks per skipper
MAX_BATCH_TILE = 4096   # ~13 MiB double-buffered per step -> fits every generation
DENSE_MIN_TILE = 64     # below this, extra zero K-rows on the MXU aren't worth it
VMEM_LIMIT_BYTES = 32 * 1024 * 1024   # explicit so the same code fits v7x's 64 MiB


def _round_up(v, m):
    return ((v + m - 1) // m) * m


# ---------------------------------------------------------------------------
# in-kernel math helpers
# ---------------------------------------------------------------------------
def _layernorm(x, w, b, n, lane):
    """LayerNorm over the true feature count ``n`` (two-pass, centered).

    ``x`` may be zero-padded beyond ``n`` lanes; padded lanes are excluded from
    the variance via a lane mask and come out exactly 0 (beta is zero-padded).
    """
    mu = jnp.sum(x, axis=-1, keepdims=True) * (1.0 / n)
    xc = x - mu
    if lane is not None and x.shape[-1] != n:
        xc = jnp.where(lane < n, xc, 0.0)        # keep padded lanes exactly zero
    var = jnp.sum(xc * xc, axis=-1, keepdims=True) * (1.0 / n)
    return xc * jax.lax.rsqrt(var + LN_EPS) * w + b


def _mm(a, w_block):
    """MXU matmul: bf16 inputs, f32 accumulation."""
    return jnp.dot(a.astype(jnp.bfloat16), w_block,
                   preferred_element_type=jnp.float32)


def _skipper(x, vec, w_ref, vrow, wblk, fin, hid, lane, dense):
    """MLPSkipper.forward on an activation block.

    x:     (TB, LANE) zero-padded (dense) or (TB, fin) (not dense), f32.
    vec:   (2*N_VEC_ROWS, LANE) f32 — rows vrow..vrow+9:
           ln0w ln0b b0a b0b ln1w ln1b b1 ln2w ln2b b2 (all zero-padded).
    w_ref: (2*N_W_BLOCKS*LANE, LANE) bf16 — 128x128 blocks wblk..wblk+3,
           each zero-padded on unused rows/cols.
    Returns (TB, LANE) f32; lanes >= fout are exactly zero.
    """
    def v(r, k=LANE):
        return vec[vrow + r:vrow + r + 1, :k]

    def w(r, k=LANE):
        base = (wblk + r) * LANE
        return w_ref[base:base + k, :]

    kin = LANE if dense else fin
    khid = LANE if dense else hid

    # LayerNorm 0 (over fin true features)
    h = _layernorm(x, v(0, kin), v(1, kin), fin, lane)
    # layers[0]: Linear(fin, hid) -> ReLU -> Linear(hid, hid)
    h = jnp.maximum(_mm(h, w(0, kin)) + v(2), 0.0)           # (TB, LANE)
    h = _mm(h, w(1)) + v(3)                                  # (TB, LANE)
    if not dense:
        h = h[:, :hid]
    # LayerNorm 1 (over hid true features)
    h = _layernorm(h, v(4, khid), v(5, khid), hid, lane)
    # layers[1]: ReLU -> Linear(hid, hid) with skip connection
    y = _mm(jnp.maximum(h, 0.0), w(2, khid)) + v(6)
    h = h + (y if dense else y[:, :hid])
    # LayerNorm 2 (over hid true features)
    h = _layernorm(h, v(7, khid), v(8, khid), hid, lane)
    # layers[2]: ReLU -> Linear(hid, fout)
    return _mm(jnp.maximum(h, 0.0), w(3, khid)) + v(9)       # (TB, LANE)


# ---------------------------------------------------------------------------
# Pallas kernel: normalize -> encoder (skipper + tanh) -> decoder (skipper)
# ---------------------------------------------------------------------------
def _ae_kernel(x_ref, rms_ref, vec_ref, w_ref, z0_ref, z1_ref, *,
               nail, hidden, hammer, dense):
    x = x_ref[...]                                  # (TB, LANE) f32, lanes>=nail are 0
    rms = rms_ref[...]                              # (2, LANE)  rows = [mean, var]
    lane = (jax.lax.broadcasted_iota(jnp.int32, (1, LANE), 1) if dense else None)
    if not dense:
        x = x[:, :nail]
        rms = rms[:, :nail]

    # RunningMeanStd.normalize: clip((x - mean) * rsqrt(var + eps), -1000, 1000)
    xn = (x - rms[0:1, :]) * jax.lax.rsqrt(rms[1:2, :] + RMS_EPS)
    xn = jnp.clip(xn, -1000.0, 1000.0)              # padded lanes stay exactly 0

    vec = vec_ref[...]                              # (20, LANE) f32

    # encoder = MLPSkipper(nail, hidden, hammer) -> Tanh
    z0 = jnp.tanh(_skipper(xn, vec, w_ref, 0, 0, nail, hidden, lane, dense))
    z0_ref[...] = z0.astype(z0_ref.dtype)           # lane-dense unmasked store

    # decoder = MLPSkipper(hammer, hidden, nail)
    zin = z0 if dense else z0[:, :hammer]
    z1 = _skipper(zin, vec, w_ref, N_VEC_ROWS, N_W_BLOCKS,
                  hammer, hidden, lane, dense)
    z1_ref[...] = z1.astype(z1_ref.dtype)           # lane-dense unmasked store


def _pallas_ae(x, rms_mean, rms_var, vec_slab, w_slab, *,
               nail, hidden, hammer, out_dtype=jnp.float32):
    batch = x.shape[0]
    assert x.shape[1] == nail
    assert max(nail, hidden, hammer) <= LANE, "feature dims must be <= 128"

    # --- batch tiling: largest tile that fits, but >= 2 grid steps when
    # padded_B >= 16 so v7x's second TensorCore gets work, and the step count
    # grows for big batches so batch padding stays small. ---
    padded8 = _round_up(batch, 8)
    if padded8 >= 16:
        steps = max(2, pl.cdiv(padded8, MAX_BATCH_TILE))
        tb = min(_round_up(pl.cdiv(padded8, steps), 8), MAX_BATCH_TILE)
    else:
        tb = padded8
    padded = _round_up(batch, tb)
    grid = (padded // tb,)
    dense = tb >= DENSE_MIN_TILE

    # --- lane-dense zero padding of x and the RMS rows (mean pad 0, var pad 1) ---
    lane_pad = LANE - nail
    x = jnp.pad(x, ((0, padded - batch), (0, lane_pad)))
    rms = jnp.concatenate([
        jnp.pad(rms_mean.astype(jnp.float32), ((0, 0), (0, lane_pad))),
        jnp.pad(rms_var.astype(jnp.float32), ((0, 0), (0, lane_pad)),
                constant_values=1.0),
    ], axis=0)                                                   # (2, LANE)

    kernel = functools.partial(_ae_kernel, nail=nail, hidden=hidden,
                               hammer=hammer, dense=dense)
    batched = lambda i: (i, 0)      # tiled over batch
    resident = lambda i: (0, 0)     # same block every step -> VMEM-resident

    out_isz = jnp.dtype(out_dtype).itemsize
    param_bytes = rms.size * 4 + vec_slab.size * 4 + w_slab.size * 2
    cost = pl.CostEstimate(
        flops=2 * padded * (2 * N_W_BLOCKS) * LANE * LANE,       # 8 128x128 dots/row
        transcendentals=padded * (LANE + 6) + grid[0] * LANE,    # tanh(128) + 6 LN rsqrt
        bytes_accessed=(padded * LANE * 4                        # x in
                        + 2 * padded * LANE * out_isz            # z0, z1 out
                        + param_bytes),
    )

    z0, z1 = pl.pallas_call(
        kernel,
        grid=grid,
        in_specs=[
            pl.BlockSpec((tb, LANE), batched),
            pl.BlockSpec(rms.shape, resident),
            pl.BlockSpec(vec_slab.shape, resident),
            pl.BlockSpec(w_slab.shape, resident),
        ],
        out_specs=(
            pl.BlockSpec((tb, LANE), batched),
            pl.BlockSpec((tb, LANE), batched),
        ),
        out_shape=(
            jax.ShapeDtypeStruct((padded, LANE), out_dtype),
            jax.ShapeDtypeStruct((padded, LANE), out_dtype),
        ),
        compiler_params=pltpu.CompilerParams(
            dimension_semantics=("parallel",),
            vmem_limit_bytes=VMEM_LIMIT_BYTES),
        cost_estimate=cost,
    )(x, rms, vec_slab, w_slab)

    return z0[:batch, :hammer], z1[:batch, :nail]


# ---------------------------------------------------------------------------
# parameter packing (do once; merged enc+dec slabs are reused every call)
# ---------------------------------------------------------------------------
def _pack_skipper(params):
    (ln0w, ln0b, w0a, b0a, w0b, b0b,
     ln1w, ln1b, w1, b1,
     ln2w, ln2b, w2, b2) = params
    vec_rows = [ln0w, ln0b, b0a, b0b, ln1w, ln1b, b1, ln2w, ln2b, b2]
    vec = jnp.zeros((N_VEC_ROWS, LANE), jnp.float32)
    for i, r in enumerate(vec_rows):
        r = jnp.reshape(r, (-1,)).astype(jnp.float32)
        vec = vec.at[i, :r.shape[0]].set(r)
    slab = jnp.zeros((N_W_BLOCKS * LANE, LANE), jnp.bfloat16)
    for i, w in enumerate([w0a, w0b, w1, w2]):
        fin, fout = w.shape
        slab = slab.at[i * LANE:i * LANE + fin, :fout].set(w.astype(jnp.bfloat16))
    return vec, slab


def pack_ae_params(enc_params, dec_params):
    """Pack encoder+decoder into one (20,128) f32 slab and one (1024,128) bf16 slab."""
    ev, ew = _pack_skipper(enc_params)
    dv, dw = _pack_skipper(dec_params)
    return jnp.concatenate([ev, dv], axis=0), jnp.concatenate([ew, dw], axis=0)


# ---------------------------------------------------------------------------
# plain-JAX glue: RunningMeanStd.update (train_yes=True) + kernel call
# ---------------------------------------------------------------------------
def mlp_skipper_ae_forward(x, rms_mean, rms_var, rms_count, slabs, dims, train_yes):
    """Mirrors MLPSkipperAE.forward(x, train_yes) -> (z0, z1) and returns the
    updated RunningMeanStd state (the PyTorch module mutates it in place)."""
    nail, hidden, hammer = dims
    if train_yes:
        batch_count = float(x.shape[0])
        batch_mean = jnp.mean(x, axis=0, keepdims=True)
        # torch.var is unbiased (ddof=1); guard batch==1 (torch would yield NaN).
        ddof = 1 if x.shape[0] > 1 else 0
        batch_var = jnp.var(x, axis=0, ddof=ddof, keepdims=True)
        delta = batch_mean - rms_mean
        tot = rms_count + batch_count
        rms_mean = rms_mean + delta * batch_count / tot
        m2 = (rms_var * rms_count + batch_var * batch_count
              + jnp.square(delta) * rms_count * batch_count / tot)
        rms_var = m2 / tot
        rms_count = tot

    vec_slab, w_slab = slabs
    z0, z1 = _pallas_ae(x, rms_mean, rms_var, vec_slab, w_slab,
                        nail=nail, hidden=hidden, hammer=hammer)
    return z0, z1, rms_mean, rms_var, rms_count


# ---------------------------------------------------------------------------
# deterministic initialization + pure-JAX reference (same math as PyTorch)
# ---------------------------------------------------------------------------
def _init_linear(key, fin, fout):
    kw, kb = jax.random.split(key)
    bound = 1.0 / np.sqrt(fin)
    w = jax.random.uniform(kw, (fin, fout), jnp.float32, -bound, bound)
    b = jax.random.uniform(kb, (1, fout), jnp.float32, -bound, bound)
    return w, b


def init_skipper_params(key, nail, hidden, hammer):
    k0, k1, k2, k3 = jax.random.split(key, 4)
    w0a, b0a = _init_linear(k0, nail, hidden)
    w0b, b0b = _init_linear(k1, hidden, hidden)
    w1, b1 = _init_linear(k2, hidden, hidden)
    w2, b2 = _init_linear(k3, hidden, hammer)
    ln0w, ln0b = jnp.ones((1, nail)), jnp.zeros((1, nail))
    ln1w, ln1b = jnp.ones((1, hidden)), jnp.zeros((1, hidden))
    ln2w, ln2b = jnp.ones((1, hidden)), jnp.zeros((1, hidden))
    return [ln0w, ln0b, w0a, b0a, w0b, b0b,
            ln1w, ln1b, w1, b1,
            ln2w, ln2b, w2, b2]


def _ref_layernorm(x, w, b):
    mu = jnp.mean(x, axis=-1, keepdims=True)
    xc = x - mu
    var = jnp.mean(xc * xc, axis=-1, keepdims=True)
    return xc * jax.lax.rsqrt(var + LN_EPS) * w + b


def _ref_skipper(x, p):
    (ln0w, ln0b, w0a, b0a, w0b, b0b, ln1w, ln1b, w1, b1, ln2w, ln2b, w2, b2) = p
    x = _ref_layernorm(x, ln0w, ln0b)
    x = jnp.maximum(jnp.dot(x, w0a) + b0a, 0.0)
    x = jnp.dot(x, w0b) + b0b
    x = _ref_layernorm(x, ln1w, ln1b)
    x = x + (jnp.dot(jnp.maximum(x, 0.0), w1) + b1)
    x = _ref_layernorm(x, ln2w, ln2b)
    return jnp.dot(jnp.maximum(x, 0.0), w2) + b2


def reference_forward(x, rms_mean, rms_var, enc_params, dec_params):
    xn = jnp.clip((x - rms_mean) / jnp.sqrt(rms_var + RMS_EPS), -1000.0, 1000.0)
    z0 = jnp.tanh(_ref_skipper(xn, enc_params))
    z1 = _ref_skipper(z0, dec_params)
    return z0, z1


if __name__ == "__main__":
    NAIL, HIDDEN, HAMMER = 32, 64, 16

    key = jax.random.PRNGKey(0)
    kx, ke, kd = jax.random.split(key, 3)

    enc_params = init_skipper_params(ke, NAIL, HIDDEN, HAMMER)
    dec_params = init_skipper_params(kd, HAMMER, HIDDEN, NAIL)
    slabs = pack_ae_params(enc_params, dec_params)   # pack once, reuse every call

    # batch=8   -> grid=(1,), tb=8,  sliced (small-tile) path
    # batch=192 -> grid=(2,), tb=96, lane-dense-128 path + batch tiling
    for batch in (8, 192):
        x = jax.random.normal(jax.random.fold_in(kx, batch), (batch, NAIL), jnp.float32)
        rms_mean = jnp.zeros((1, NAIL), jnp.float32)
        rms_var = jnp.ones((1, NAIL), jnp.float32)
        rms_count = RMS_EPS

        for train_yes in (False, True):
            z0, z1, new_mean, new_var, rms_count = mlp_skipper_ae_forward(
                x, rms_mean, rms_var, rms_count, slabs,
                (NAIL, HIDDEN, HAMMER), train_yes)
            jax.block_until_ready((z0, z1))

            # sanity check against a pure-JAX f32 reference of the same math
            rz0, rz1 = reference_forward(x, new_mean, new_var, enc_params, dec_params)
            assert z0.shape == (batch, HAMMER) and z1.shape == (batch, NAIL)
            assert jnp.allclose(z0, rz0, atol=2e-2, rtol=2e-2), "z0 mismatch"
            assert jnp.allclose(z1, rz1, atol=2e-2, rtol=2e-2), "z1 mismatch"
            rms_mean, rms_var = new_mean, new_var

    print("KERNEL_OK")
</pallas_src>

<mosaic_0001>
module attributes {stable_mosaic.version = 11 : i64} {
  func.func @_ae_kernel(%arg0: i32, %arg1: memref<8x128xf32, #tpu.memory_space<vmem>>, %arg2: memref<2x128xf32, #tpu.memory_space<vmem>>, %arg3: memref<20x128xf32, #tpu.memory_space<vmem>>, %arg4: memref<1024x128xbf16, #tpu.memory_space<vmem>>, %arg5: memref<8x128xf32, #tpu.memory_space<vmem>>, %arg6: memref<8x128xf32, #tpu.memory_space<vmem>>) attributes {dimension_semantics = [#tpu.dimension_semantics<parallel>], iteration_bounds = array<i64: 1>, scalar_prefetch = 0 : i64, scratch_operands = 0 : i64, tpu.core_type = #tpu.core_type<tc>, window_params = [{transform_indices = @transform_0, window_bounds = array<i64: 8, 128>}, {pipeline_mode = #tpu.pipeline_mode<synchronous>, transform_indices = @transform_1, window_bounds = array<i64: 2, 128>}, {pipeline_mode = #tpu.pipeline_mode<synchronous>, transform_indices = @transform_2, window_bounds = array<i64: 20, 128>}, {pipeline_mode = #tpu.pipeline_mode<synchronous>, transform_indices = @transform_3, window_bounds = array<i64: 1024, 128>}, {transform_indices = @transform_4, window_bounds = array<i64: 8, 128>}, {transform_indices = @transform_5, window_bounds = array<i64: 8, 128>}]} {
    %c0 = arith.constant 0 : index
    %c0_0 = arith.constant 0 : index
    %0 = vector.load %arg1[%c0, %c0_0] : memref<8x128xf32, #tpu.memory_space<vmem>>, vector<8x128xf32>
    %c0_1 = arith.constant 0 : index
    %c0_2 = arith.constant 0 : index
    %1 = vector.load %arg2[%c0_1, %c0_2] : memref<2x128xf32, #tpu.memory_space<vmem>>, vector<2x128xf32>
    %2 = vector.extract_strided_slice %0 {offsets = [0, 0], sizes = [8, 32], strides = [1, 1]} : vector<8x128xf32> to vector<8x32xf32>
    %3 = vector.extract_strided_slice %1 {offsets = [0, 0], sizes = [2, 32], strides = [1, 1]} : vector<2x128xf32> to vector<2x32xf32>
    %4 = vector.extract_strided_slice %3 {offsets = [0, 0], sizes = [1, 32], strides = [1, 1]} : vector<2x32xf32> to vector<1x32xf32>
    %5 = vector.broadcast %4 : vector<1x32xf32> to vector<8x32xf32>
    %6 = arith.subf %2, %5 : vector<8x32xf32>
    %7 = vector.extract_strided_slice %3 {offsets = [1, 0], sizes = [1, 32], strides = [1, 1]} : vector<2x32xf32> to vector<1x32xf32>
    %cst = arith.constant 9.99999974E-5 : f32
    %8 = vector.broadcast %cst : f32 to vector<1x32xf32>
    %9 = arith.addf %7, %8 : vector<1x32xf32>
    %10 = math.rsqrt %9 : vector<1x32xf32>
    %11 = vector.broadcast %10 : vector<1x32xf32> to vector<8x32xf32>
    %12 = arith.mulf %6, %11 : vector<8x32xf32>
    %cst_3 = arith.constant -1.000000e+03 : f32
    %cst_4 = arith.constant 1.000000e+03 : f32
    %13 = vector.broadcast %cst_3 : f32 to vector<8x32xf32>
    %14 = arith.maximumf %13, %12 : vector<8x32xf32>
    %15 = vector.broadcast %cst_4 : f32 to vector<8x32xf32>
    %16 = arith.minimumf %15, %14 : vector<8x32xf32>
    %c0_5 = arith.constant 0 : index
    %c0_6 = arith.constant 0 : index
    %17 = vector.load %arg3[%c0_5, %c0_6] : memref<20x128xf32, #tpu.memory_space<vmem>>, vector<20x128xf32>
    %18 = vector.extract_strided_slice %17 {offsets = [0, 0], sizes = [1, 32], strides = [1, 1]} : vector<20x128xf32> to vector<1x32xf32>
    %19 = vector.extract_strided_slice %17 {offsets = [1, 0], sizes = [1, 32], strides = [1, 1]} : vector<20x128xf32> to vector<1x32xf32>
    %cst_7 = arith.constant dense<0.000000e+00> : vector<8xf32>
    %20 = vector.multi_reduction <add>, %16, %cst_7 [1] : vector<8x32xf32> to vector<8xf32>
    %21 = vector.shape_cast %20 : vector<8xf32> to vector<8x1xf32>
    %cst_8 = arith.constant 3.125000e-02 : f32
    %22 = vector.broadcast %cst_8 : f32 to vector<8x1xf32>
    %23 = arith.mulf %21, %22 : vector<8x1xf32>
    %24 = vector.broadcast %23 : vector<8x1xf32> to vector<8x32xf32>
    %25 = arith.subf %16, %24 : vector<8x32xf32>
    %26 = arith.mulf %25, %25 : vector<8x32xf32>
    %cst_9 = arith.constant dense<0.000000e+00> : vector<8xf32>
    %27 = vector.multi_reduction <add>, %26, %cst_9 [1] : vector<8x32xf32> to vector<8xf32>
    %28 = vector.shape_cast %27 : vector<8xf32> to vector<8x1xf32>
    %cst_10 = arith.constant 3.125000e-02 : f32
    %29 = vector.broadcast %cst_10 : f32 to vector<8x1xf32>
    %30 = arith.mulf %28, %29 : vector<8x1xf32>
    %cst_11 = arith.constant 9.99999974E-6 : f32
    %31 = vector.broadcast %cst_11 : f32 to vector<8x1xf32>
    %32 = arith.addf %30, %31 : vector<8x1xf32>
    %33 = math.rsqrt %32 : vector<8x1xf32>
    %34 = vector.broadcast %33 : vector<8x1xf32> to vector<8x32xf32>
    %35 = arith.mulf %25, %34 : vector<8x32xf32>
    %36 = vector.broadcast %18 : vector<1x32xf32> to vector<8x32xf32>
    %37 = arith.mulf %35, %36 : vector<8x32xf32>
    %38 = vector.broadcast %19 : vector<1x32xf32> to vector<8x32xf32>
    %39 = arith.addf %37, %38 : vector<8x32xf32>
    %c0_12 = arith.constant 0 : index
    %c0_13 = arith.constant 0 : index
    %40 = vector.load %arg4[%c0_12, %c0_13] : memref<1024x128xbf16, #tpu.memory_space<vmem>>, vector<32x128xbf16>
    %41 = arith.truncf %39 : vector<8x32xf32> to vector<8x32xbf16>
    %cst_14 = arith.constant dense<0.000000e+00> : vector<8x128xf32>
    %42 = tpu.matmul %41, %40, %cst_14 {dimension_numbers = #tpu.dot_dimension_numbers<[1], [0], [0], [1], [0, 0, 1, 1], [], []>} : vector<8x32xbf16>, vector<32x128xbf16>, vector<8x128xf32> -> vector<8x128xf32>
    %43 = vector.extract_strided_slice %17 {offsets = [2, 0], sizes = [1, 128], strides = [1, 1]} : vector<20x128xf32> to vector<1x128xf32>
    %44 = vector.broadcast %43 : vector<1x128xf32> to vector<8x128xf32>
    %45 = arith.addf %42, %44 : vector<8x128xf32>
    %cst_15 = arith.constant 0.000000e+00 : f32
    %46 = vector.broadcast %cst_15 : f32 to vector<8x128xf32>
    %47 = arith.maximumf %45, %46 : vector<8x128xf32>
    %c128 = arith.constant 128 : index
    %c0_16 = arith.constant 0 : index
    %48 = vector.load %arg4[%c128, %c0_16] : memref<1024x128xbf16, #tpu.memory_space<vmem>>, vector<128x128xbf16>
    %49 = arith.truncf %47 : vector<8x128xf32> to vector<8x128xbf16>
    %cst_17 = arith.constant dense<0.000000e+00> : vector<8x128xf32>
    %50 = tpu.matmul %49, %48, %cst_17 {dimension_numbers = #tpu.dot_dimension_numbers<[1], [0], [0], [1], [0, 0, 1, 1], [], []>} : vector<8x128xbf16>, vector<128x128xbf16>, vector<8x128xf32> -> vector<8x128xf32>
    %51 = vector.extract_strided_slice %17 {offsets = [3, 0], sizes = [1, 128], strides = [1, 1]} : vector<20x128xf32> to vector<1x128xf32>
    %52 = vector.broadcast %51 : vector<1x128xf32> to vector<8x128xf32>
    %53 = arith.addf %50, %52 : vector<8x128xf32>
    %54 = vector.extract_strided_slice %53 {offsets = [0, 0], sizes = [8, 64], strides = [1, 1]} : vector<8x128xf32> to vector<8x64xf32>
    %55 = vector.extract_strided_slice %17 {offsets = [4, 0], sizes = [1, 64], strides = [1, 1]} : vector<20x128xf32> to vector<1x64xf32>
    %56 = vector.extract_strided_slice %17 {offsets = [5, 0], sizes = [1, 64], strides = [1, 1]} : vector<20x128xf32> to vector<1x64xf32>
    %cst_18 = arith.constant dense<0.000000e+00> : vector<8xf32>
    %57 = vector.multi_reduction <add>, %54, %cst_18 [1] : vector<8x64xf32> to vector<8xf32>
    %58 = vector.shape_cast %57 : vector<8xf32> to vector<8x1xf32>
    %cst_19 = arith.constant 1.562500e-02 : f32
    %59 = vector.broadcast %cst_19 : f32 to vector<8x1xf32>
    %60 = arith.mulf %58, %59 : vector<8x1xf32>
    %61 = vector.broadcast %60 : vector<8x1xf32> to vector<8x64xf32>
    %62 = arith.subf %54, %61 : vector<8x64xf32>
    %63 = arith.mulf %62, %62 : vector<8x64xf32>
    %cst_20 = arith.constant dense<0.000000e+00> : vector<8xf32>
    %64 = vector.multi_reduction <add>, %63, %cst_20 [1] : vector<8x64xf32> to vector<8xf32>
    %65 = vector.shape_cast %64 : vector<8xf32> to vector<8x1xf32>
    %cst_21 = arith.constant 1.562500e-02 : f32
    %66 = vector.broadcast %cst_21 : f32 to vector<8x1xf32>
    %67 = arith.mulf %65, %66 : vector<8x1xf32>
    %cst_22 = arith.constant 9.99999974E-6 : f32
    %68 = vector.broadcast %cst_22 : f32 to vector<8x1xf32>
    %69 = arith.addf %67, %68 : vector<8x1xf32>
    %70 = math.rsqrt %69 : vector<8x1xf32>
    %71 = vector.broadcast %70 : vector<8x1xf32> to vector<8x64xf32>
    %72 = arith.mulf %62, %71 : vector<8x64xf32>
    %73 = vector.broadcast %55 : vector<1x64xf32> to vector<8x64xf32>
    %74 = arith.mulf %72, %73 : vector<8x64xf32>
    %75 = vector.broadcast %56 : vector<1x64xf32> to vector<8x64xf32>
    %76 = arith.addf %74, %75 : vector<8x64xf32>
    %cst_23 = arith.constant 0.000000e+00 : f32
    %77 = vector.broadcast %cst_23 : f32 to vector<8x64xf32>
    %78 = arith.maximumf %76, %77 : vector<8x64xf32>
    %c256 = arith.constant 256 : index
    %c0_24 = arith.constant 0 : index
    %79 = vector.load %arg4[%c256, %c0_24] : memref<1024x128xbf16, #tpu.memory_space<vmem>>, vector<64x128xbf16>
    %80 = arith.truncf %78 : vector<8x64xf32> to vector<8x64xbf16>
    %cst_25 = arith.constant dense<0.000000e+00> : vector<8x128xf32>
    %81 = tpu.matmul %80, %79, %cst_25 {dimension_numbers = #tpu.dot_dimension_numbers<[1], [0], [0], [1], [0, 0, 1, 1], [], []>} : vector<8x64xbf16>, vector<64x128xbf16>, vector<8x128xf32> -> vector<8x128xf32>
    %82 = vector.extract_strided_slice %17 {offsets = [6, 0], sizes = [1, 128], strides = [1, 1]} : vector<20x128xf32> to vector<1x128xf32>
    %83 = vector.broadcast %82 : vector<1x128xf32> to vector<8x128xf32>
    %84 = arith.addf %81, %83 : vector<8x128xf32>
    %85 = vector.extract_strided_slice %84 {offsets = [0, 0], sizes = [8, 64], strides = [1, 1]} : vector<8x128xf32> to vector<8x64xf32>
    %86 = arith.addf %76, %85 : vector<8x64xf32>
    %87 = vector.extract_strided_slice %17 {offsets = [7, 0], sizes = [1, 64], strides = [1, 1]} : vector<20x128xf32> to vector<1x64xf32>
    %88 = vector.extract_strided_slice %17 {offsets = [8, 0], sizes = [1, 64], strides = [1, 1]} : vector<20x128xf32> to vector<1x64xf32>
    %cst_26 = arith.constant dense<0.000000e+00> : vector<8xf32>
    %89 = vector.multi_reduction <add>, %86, %cst_26 [1] : vector<8x64xf32> to vector<8xf32>
    %90 = vector.shape_cast %89 : vector<8xf32> to vector<8x1xf32>
    %cst_27 = arith.constant 1.562500e-02 : f32
    %91 = vector.broadcast %cst_27 : f32 to vector<8x1xf32>
    %92 = arith.mulf %90, %91 : vector<8x1xf32>
    %93 = vector.broadcast %92 : vector<8x1xf32> to vector<8x64xf32>
    %94 = arith.subf %86, %93 : vector<8x64xf32>
    %95 = arith.mulf %94, %94 : vector<8x64xf32>
    %cst_28 = arith.constant dense<0.000000e+00> : vector<8xf32>
    %96 = vector.multi_reduction <add>, %95, %cst_28 [1] : vector<8x64xf32> to vector<8xf32>
    %97 = vector.shape_cast %96 : vector<8xf32> to vector<8x1xf32>
    %cst_29 = arith.constant 1.562500e-02 : f32
    %98 = vector.broadcast %cst_29 : f32 to vector<8x1xf32>
    %99 = arith.mulf %97, %98 : vector<8x1xf32>
    %cst_30 = arith.constant 9.99999974E-6 : f32
    %100 = vector.broadcast %cst_30 : f32 to vector<8x1xf32>
    %101 = arith.addf %99, %100 : vector<8x1xf32>
    %102 = math.rsqrt %101 : vector<8x1xf32>
    %103 = vector.broadcast %102 : vector<8x1xf32> to vector<8x64xf32>
    %104 = arith.mulf %94, %103 : vector<8x64xf32>
    %105 = vector.broadcast %87 : vector<1x64xf32> to vector<8x64xf32>
    %106 = arith.mulf %104, %105 : vector<8x64xf32>
    %107 = vector.broadcast %88 : vector<1x64xf32> to vector<8x64xf32>
    %108 = arith.addf %106, %107 : vector<8x64xf32>
    %cst_31 = arith.constant 0.000000e+00 : f32
    %109 = vector.broadcast %cst_31 : f32 to vector<8x64xf32>
    %110 = arith.maximumf %108, %109 : vector<8x64xf32>
    %c384 = arith.constant 384 : index
    %c0_32 = arith.constant 0 : index
    %111 = vector.load %arg4[%c384, %c0_32] : memref<1024x128xbf16, #tpu.memory_space<vmem>>, vector<64x128xbf16>
    %112 = arith.truncf %110 : vector<8x64xf32> to vector<8x64xbf16>
    %cst_33 = arith.constant dense<0.000000e+00> : vector<8x128xf32>
    %113 = tpu.matmul %112, %111, %cst_33 {dimension_numbers = #tpu.dot_dimension_numbers<[1], [0], [0], [1], [0, 0, 1, 1], [], []>} : vector<8x64xbf16>, vector<64x128xbf16>, vector<8x128xf32> -> vector<8x128xf32>
    %114 = vector.extract_strided_slice %17 {offsets = [9, 0], sizes = [1, 128], strides = [1, 1]} : vector<20x128xf32> to vector<1x128xf32>
    %115 = vector.broadcast %114 : vector<1x128xf32> to vector<8x128xf32>
    %116 = arith.addf %113, %115 : vector<8x128xf32>
    %117 = math.tanh %116 : vector<8x128xf32>
    %c0_34 = arith.constant 0 : index
    %c0_35 = arith.constant 0 : index
    %118 = vector.load %arg5[%c0_34, %c0_35] : memref<8x128xf32, #tpu.memory_space<vmem>>, vector<8x128xf32>
    tpu.vector_store %arg5[%c0_34, %c0_35], %117 {strides = array<i32>} : memref<8x128xf32, #tpu.memory_space<vmem>>, vector<8x128xf32>,
    %119 = vector.extract_strided_slice %117 {offsets = [0, 0], sizes = [8, 16], strides = [1, 1]} : vector<8x128xf32> to vector<8x16xf32>
    %120 = vector.extract_strided_slice %17 {offsets = [10, 0], sizes = [1, 16], strides = [1, 1]} : vector<20x128xf32> to vector<1x16xf32>
    %121 = vector.extract_strided_slice %17 {offsets = [11, 0], sizes = [1, 16], strides = [1, 1]} : vector<20x128xf32> to vector<1x16xf32>
    %cst_36 = arith.constant dense<0.000000e+00> : vector<8xf32>
    %122 = vector.multi_reduction <add>, %119, %cst_36 [1] : vector<8x16xf32> to vector<8xf32>
    %123 = vector.shape_cast %122 : vector<8xf32> to vector<8x1xf32>
    %cst_37 = arith.constant 6.250000e-02 : f32
    %124 = vector.broadcast %cst_37 : f32 to vector<8x1xf32>
    %125 = arith.mulf %123, %124 : vector<8x1xf32>
    %126 = vector.broadcast %125 : vector<8x1xf32> to vector<8x16xf32>
    %127 = arith.subf %119, %126 : vector<8x16xf32>
    %128 = arith.mulf %127, %127 : vector<8x16xf32>
    %cst_38 = arith.constant dense<0.000000e+00> : vector<8xf32>
    %129 = vector.multi_reduction <add>, %128, %cst_38 [1] : vector<8x16xf32> to vector<8xf32>
    %130 = vector.shape_cast %129 : vector<8xf32> to vector<8x1xf32>
    %cst_39 = arith.constant 6.250000e-02 : f32
    %131 = vector.broadcast %cst_39 : f32 to vector<8x1xf32>
    %132 = arith.mulf %130, %131 : vector<8x1xf32>
    %cst_40 = arith.constant 9.99999974E-6 : f32
    %133 = vector.broadcast %cst_40 : f32 to vector<8x1xf32>
    %134 = arith.addf %132, %133 : vector<8x1xf32>
    %135 = math.rsqrt %134 : vector<8x1xf32>
    %136 = vector.broadcast %135 : vector<8x1xf32> to vector<8x16xf32>
    %137 = arith.mulf %127, %136 : vector<8x16xf32>
    %138 = vector.broadcast %120 : vector<1x16xf32> to vector<8x16xf32>
    %139 = arith.mulf %137, %138 : vector<8x16xf32>
    %140 = vector.broadcast %121 : vector<1x16xf32> to vector<8x16xf32>
    %141 = arith.addf %139, %140 : vector<8x16xf32>
    %c512 = arith.constant 512 : index
    %c0_41 = arith.constant 0 : index
    %142 = vector.load %arg4[%c512, %c0_41] : memref<1024x128xbf16, #tpu.memory_space<vmem>>, vector<16x128xbf16>
    %143 = arith.truncf %141 : vector<8x16xf32> to vector<8x16xbf16>
    %cst_42 = arith.constant dense<0.000000e+00> : vector<8x128xf32>
    %144 = tpu.matmul %143, %142, %cst_42 {dimension_numbers = #tpu.dot_dimension_numbers<[1], [0], [0], [1], [0, 0, 1, 1], [], []>} : vector<8x16xbf16>, vector<16x128xbf16>, vector<8x128xf32> -> vector<8x128xf32>
    %145 = vector.extract_strided_slice %17 {offsets = [12, 0], sizes = [1, 128], strides = [1, 1]} : vector<20x128xf32> to vector<1x128xf32>
    %146 = vector.broadcast %145 : vector<1x128xf32> to vector<8x128xf32>
    %147 = arith.addf %144, %146 : vector<8x128xf32>
    %cst_43 = arith.constant 0.000000e+00 : f32
    %148 = vector.broadcast %cst_43 : f32 to vector<8x128xf32>
    %149 = arith.maximumf %147, %148 : vector<8x128xf32>
    %c640 = arith.constant 640 : index
    %c0_44 = arith.constant 0 : index
    %150 = vector.load %arg4[%c640, %c0_44] : memref<1024x128xbf16, #tpu.memory_space<vmem>>, vector<128x128xbf16>
    %151 = arith.truncf %149 : vector<8x128xf32> to vector<8x128xbf16>
    %cst_45 = arith.constant dense<0.000000e+00> : vector<8x128xf32>
    %152 = tpu.matmul %151, %150, %cst_45 {dimension_numbers = #tpu.dot_dimension_numbers<[1], [0], [0], [1], [0, 0, 1, 1], [], []>} : vector<8x128xbf16>, vector<128x128xbf16>, vector<8x128xf32> -> vector<8x128xf32>
    %153 = vector.extract_strided_slice %17 {offsets = [13, 0], sizes = [1, 128], strides = [1, 1]} : vector<20x128xf32> to vector<1x128xf32>
    %154 = vector.broadcast %153 : vector<1x128xf32> to vector<8x128xf32>
    %155 = arith.addf %152, %154 : vector<8x128xf32>
    %156 = vector.extract_strided_slice %155 {offsets = [0, 0], sizes = [8, 64], strides = [1, 1]} : vector<8x128xf32> to vector<8x64xf32>
    %157 = vector.extract_strided_slice %17 {offsets = [14, 0], sizes = [1, 64], strides = [1, 1]} : vector<20x128xf32> to vector<1x64xf32>
    %158 = vector.extract_strided_slice %17 {offsets = [15, 0], sizes = [1, 64], strides = [1, 1]} : vector<20x128xf32> to vector<1x64xf32>
    %cst_46 = arith.constant dense<0.000000e+00> : vector<8xf32>
    %159 = vector.multi_reduction <add>, %156, %cst_46 [1] : vector<8x64xf32> to vector<8xf32>
    %160 = vector.shape_cast %159 : vector<8xf32> to vector<8x1xf32>
    %cst_47 = arith.constant 1.562500e-02 : f32
    %161 = vector.broadcast %cst_47 : f32 to vector<8x1xf32>
    %162 = arith.mulf %160, %161 : vector<8x1xf32>
    %163 = vector.broadcast %162 : vector<8x1xf32> to vector<8x64xf32>
    %164 = arith.subf %156, %163 : vector<8x64xf32>
    %165 = arith.mulf %164, %164 : vector<8x64xf32>
    %cst_48 = arith.constant dense<0.000000e+00> : vector<8xf32>
    %166 = vector.multi_reduction <add>, %165, %cst_48 [1] : vector<8x64xf32> to vector<8xf32>
    %167 = vector.shape_cast %166 : vector<8xf32> to vector<8x1xf32>
    %cst_49 = arith.constant 1.562500e-02 : f32
    %168 = vector.broadcast %cst_49 : f32 to vector<8x1xf32>
    %169 = arith.mulf %167, %168 : vector<8x1xf32>
    %cst_50 = arith.constant 9.99999974E-6 : f32
    %170 = vector.broadcast %cst_50 : f32 to vector<8x1xf32>
    %171 = arith.addf %169, %170 : vector<8x1xf32>
    %172 = math.rsqrt %171 : vector<8x1xf32>
    %173 = vector.broadcast %172 : vector<8x1xf32> to vector<8x64xf32>
    %174 = arith.mulf %164, %173 : vector<8x64xf32>
    %175 = vector.broadcast %157 : vector<1x64xf32> to vector<8x64xf32>
    %176 = arith.mulf %174, %175 : vector<8x64xf32>
    %177 = vector.broadcast %158 : vector<1x64xf32> to vector<8x64xf32>
    %178 = arith.addf %176, %177 : vector<8x64xf32>
    %cst_51 = arith.constant 0.000000e+00 : f32
    %179 = vector.broadcast %cst_51 : f32 to vector<8x64xf32>
    %180 = arith.maximumf %178, %179 : vector<8x64xf32>
    %c768 = arith.constant 768 : index
    %c0_52 = arith.constant 0 : index
    %181 = vector.load %arg4[%c768, %c0_52] : memref<1024x128xbf16, #tpu.memory_space<vmem>>, vector<64x128xbf16>
    %182 = arith.truncf %180 : vector<8x64xf32> to vector<8x64xbf16>
    %cst_53 = arith.constant dense<0.000000e+00> : vector<8x128xf32>
    %183 = tpu.matmul %182, %181, %cst_53 {dimension_numbers = #tpu.dot_dimension_numbers<[1], [0], [0], [1], [0, 0, 1, 1], [], []>} : vector<8x64xbf16>, vector<64x128xbf16>, vector<8x128xf32> -> vector<8x128xf32>
    %184 = vector.extract_strided_slice %17 {offsets = [16, 0], sizes = [1, 128], strides = [1, 1]} : vector<20x128xf32> to vector<1x128xf32>
    %185 = vector.broadcast %184 : vector<1x128xf32> to vector<8x128xf32>
    %186 = arith.addf %183, %185 : vector<8x128xf32>
    %187 = vector.extract_strided_slice %186 {offsets = [0, 0], sizes = [8, 64], strides = [1, 1]} : vector<8x128xf32> to vector<8x64xf32>
    %188 = arith.addf %178, %187 : vector<8x64xf32>
    %189 = vector.extract_strided_slice %17 {offsets = [17, 0], sizes = [1, 64], strides = [1, 1]} : vector<20x128xf32> to vector<1x64xf32>
    %190 = vector.extract_strided_slice %17 {offsets = [18, 0], sizes = [1, 64], strides = [1, 1]} : vector<20x128xf32> to vector<1x64xf32>
    %cst_54 = arith.constant dense<0.000000e+00> : vector<8xf32>
    %191 = vector.multi_reduction <add>, %188, %cst_54 [1] : vector<8x64xf32> to vector<8xf32>
    %192 = vector.shape_cast %191 : vector<8xf32> to vector<8x1xf32>
    %cst_55 = arith.constant 1.562500e-02 : f32
    %193 = vector.broadcast %cst_55 : f32 to vector<8x1xf32>
    %194 = arith.mulf %192, %193 : vector<8x1xf32>
    %195 = vector.broadcast %194 : vector<8x1xf32> to vector<8x64xf32>
    %196 = arith.subf %188, %195 : vector<8x64xf32>
    %197 = arith.mulf %196, %196 : vector<8x64xf32>
    %cst_56 = arith.constant dense<0.000000e+00> : vector<8xf32>
    %198 = vector.multi_reduction <add>, %197, %cst_56 [1] : vector<8x64xf32> to vector<8xf32>
    %199 = vector.shape_cast %198 : vector<8xf32> to vector<8x1xf32>
    %cst_57 = arith.constant 1.562500e-02 : f32
    %200 = vector.broadcast %cst_57 : f32 to vector<8x1xf32>
    %201 = arith.mulf %199, %200 : vector<8x1xf32>
    %cst_58 = arith.constant 9.99999974E-6 : f32
    %202 = vector.broadcast %cst_58 : f32 to vector<8x1xf32>
    %203 = arith.addf %201, %202 : vector<8x1xf32>
    %204 = math.rsqrt %203 : vector<8x1xf32>
    %205 = vector.broadcast %204 : vector<8x1xf32> to vector<8x64xf32>
    %206 = arith.mulf %196, %205 : vector<8x64xf32>
    %207 = vector.broadcast %189 : vector<1x64xf32> to vector<8x64xf32>
    %208 = arith.mulf %206, %207 : vector<8x64xf32>
    %209 = vector.broadcast %190 : vector<1x64xf32> to vector<8x64xf32>
    %210 = arith.addf %208, %209 : vector<8x64xf32>
    %cst_59 = arith.constant 0.000000e+00 : f32
    %211 = vector.broadcast %cst_59 : f32 to vector<8x64xf32>
    %212 = arith.maximumf %210, %211 : vector<8x64xf32>
    %c896 = arith.constant 896 : index
    %c0_60 = arith.constant 0 : index
    %213 = vector.load %arg4[%c896, %c0_60] : memref<1024x128xbf16, #tpu.memory_space<vmem>>, vector<64x128xbf16>
    %214 = arith.truncf %212 : vector<8x64xf32> to vector<8x64xbf16>
    %cst_61 = arith.constant dense<0.000000e+00> : vector<8x128xf32>
    %215 = tpu.matmul %214, %213, %cst_61 {dimension_numbers = #tpu.dot_dimension_numbers<[1], [0], [0], [1], [0, 0, 1, 1], [], []>} : vector<8x64xbf16>, vector<64x128xbf16>, vector<8x128xf32> -> vector<8x128xf32>
    %216 = vector.extract_strided_slice %17 {offsets = [19, 0], sizes = [1, 128], strides = [1, 1]} : vector<20x128xf32> to vector<1x128xf32>
    %217 = vector.broadcast %216 : vector<1x128xf32> to vector<8x128xf32>
    %218 = arith.addf %215, %217 : vector<8x128xf32>
    %c0_62 = arith.constant 0 : index
    %c0_63 = arith.constant 0 : index
    %219 = vector.load %arg6[%c0_62, %c0_63] : memref<8x128xf32, #tpu.memory_space<vmem>>, vector<8x128xf32>
    tpu.vector_store %arg6[%c0_62, %c0_63], %218 {strides = array<i32>} : memref<8x128xf32, #tpu.memory_space<vmem>>, vector<8x128xf32>,
    return
  }
  func.func @transform_0(%arg0: i32) -> (i32, i32) {
    %c0_i32 = arith.constant 0 : i32
    %c0_i32_0 = arith.constant 0 : i32
    return %arg0, %c0_i32 : i32, i32
  }
  func.func @transform_1(%arg0: i32) -> (i32, i32) {
    %c0_i32 = arith.constant 0 : i32
    %c0_i32_0 = arith.constant 0 : i32
    %c0_i32_1 = arith.constant 0 : i32
    return %c0_i32, %c0_i32_0 : i32, i32
  }
  func.func @transform_2(%arg0: i32) -> (i32, i32) {
    %c0_i32 = arith.constant 0 : i32
    %c0_i32_0 = arith.constant 0 : i32
    %c0_i32_1 = arith.constant 0 : i32
    return %c0_i32, %c0_i32_0 : i32, i32
  }
  func.func @transform_3(%arg0: i32) -> (i32, i32) {
    %c0_i32 = arith.constant 0 : i32
    %c0_i32_0 = arith.constant 0 : i32
    %c0_i32_1 = arith.constant 0 : i32
    return %c0_i32, %c0_i32_0 : i32, i32
  }
  func.func @transform_4(%arg0: i32) -> (i32, i32) {
    %c0_i32 = arith.constant 0 : i32
    %c0_i32_0 = arith.constant 0 : i32
    return %arg0, %c0_i32 : i32, i32
  }
  func.func @transform_5(%arg0: i32) -> (i32, i32) {
    %c0_i32 = arith.constant 0 : i32
    %c0_i32_0 = arith.constant 0 : i32
    return %arg0, %c0_i32 : i32, i32
  }
}

</mosaic_0001>

<llo_original>
// kernel: tpu_custom_call.1
$region0: #{tpu_custom_call.1}
  #allocation0 [shape = 'u32[]', space=smem, size = 0x4, offset = 0x4, fixed_abs, tag = 'smem constant byte address 0x4 - core index']
  #allocation1 [shape = 'u32[72,128]{1,0:T(1,128)}', space=vmem, size = 0x9000, scoped, tag = 'internal scratch']
  %s0 = inlined_call_operand.hbm [shape: f32[8,128], index: 0, kind: input, shape index: {}]
  %s1 = inlined_call_operand.hbm [shape: f32[2,128], index: 1, kind: input, shape index: {}]
  %s2 = inlined_call_operand.hbm [shape: f32[20,128], index: 2, kind: input, shape index: {}]
  %s3 = inlined_call_operand.hbm [shape: bf16[1024,128], index: 3, kind: input, shape index: {}]
  %s4 = inlined_call_operand.hbm [shape: f32[8,128], index: 4, kind: output, shape index: {0}]
  %s5 = inlined_call_operand.hbm [shape: f32[8,128], index: 5, kind: output, shape index: {1}]
  %6 = xla_tuple %s4, %s5
  %s7 = sld [smem:[#allocation0]]
  $region50: #{tpu_custom_call.1} parent=0
    _
  %s9 = ssub.s32 1, %s7
  %s10 = scalar_select 0, %s9, %s7
  $region1: #{tpu_custom_call.1} parent=0
    #allocation2 [shape = 'u8[4096]{0}', space=vmem, size = 0x1000, scoped, tag = 'input window, operand 0, single buffered']
    #allocation3 [shape = 's32[1]{0}', space=sflag, size = 0x4, scoped, tag = 'scoped memory for tpu_custom_call.1']
    #allocation4 [shape = 's32[1]{0}', space=sflag, size = 0x4, scoped, tag = 'scoped memory for tpu_custom_call.1']
    #allocation5 [shape = 'u8[1024]{0}', space=vmem, size = 0x400, scoped, tag = 'input window, operand 1, single buffered']
    #allocation6 [shape = 's32[1]{0}', space=sflag, size = 0x4, scoped, tag = 'scoped memory for tpu_custom_call.1']
    #allocation7 [shape = 'u8[12288]{0}', space=vmem, size = 0x3000, scoped, tag = 'input window, operand 2, single buffered']
    #allocation8 [shape = 'u8[262144]{0}', space=vmem, size = 0x40000, scoped, tag = 'input window, operand 3, single buffered']
    #allocation9 [shape = 's32[1]{0}', space=sflag, size = 0x4, scoped, tag = 'scoped memory for tpu_custom_call.1']
    #allocation10 [shape = 'u8[4096]{0}', space=vmem, size = 0x1000, scoped, tag = 'output window, operand 0, single buffered']
    #allocation11 [shape = 'u8[4096]{0}', space=vmem, size = 0x1000, scoped, tag = 'output window, operand 1, single buffered']
    #allocation12 [shape = 's32[1]{0}', space=sflag, size = 0x4, scoped, tag = 'scoped memory for tpu_custom_call.1']
    %11 = vsyncpa [#allocation3], 0
    %12 = vsyncpa [#allocation6], 0
    %13 = vsyncpa [#allocation9], 0
    %14 = vsyncpa [#allocation4], 0
    %15 = vsyncpa [#allocation12], 0
    // Predicated region
    $region2: #{tpu_custom_call.1} parent=1 // pred_check
      _
    $region3: #{tpu_custom_call.1} parent=1 // pred_check_branch
      %17 = sbr.rel (0) target = $region5
    $region4: #{tpu_custom_call.1} parent=1 // pred_region
      %19 = vsyncadd [#allocation3], 0
      %s21 = sshll.u32 %s0, 4
      %s22 = int_to_ptr.hbm [resolvable:$true] %s21
      %s23 = sshll.u32 [#allocation2], 4
      %s24 = int_to_ptr.vmem [resolvable:$true] %s23
      %26 = dma.hbm_to_vmem [thread:$0]  %s22, 128, %s24, [#allocation3]
    $region5: #{tpu_custom_call.1} parent=1 // pred_fallthru
      _
    // Predicated region
    $region6: #{tpu_custom_call.1} parent=1 // pred_check
      _
    $region7: #{tpu_custom_call.1} parent=1 // pred_check_branch
      %28 = sbr.rel (0) target = $region9
    $region8: #{tpu_custom_call.1} parent=1 // pred_region
      %30 = vsyncadd [#allocation6], 0
      %s32 = sshll.u32 %s1, 4
      %s33 = int_to_ptr.hbm [resolvable:$true] %s32
      %s34 = sshll.u32 [#allocation5], 4
      %s35 = int_to_ptr.vmem [resolvable:$true] %s34
      %37 = dma.hbm_to_vmem [thread:$0]  %s33, 32, %s35, [#allocation6]
    $region9: #{tpu_custom_call.1} parent=1 // pred_fallthru
      _
    // Predicated region
    $region10: #{tpu_custom_call.1} parent=1 // pred_check
      _
    $region11: #{tpu_custom_call.1} parent=1 // pred_check_branch
      %39 = sbr.rel (0) target = $region13
    $region12: #{tpu_custom_call.1} parent=1 // pred_region
      %41 = vsyncadd [#allocation6], 0
      %s42 = sshll.u32 %s2, 4
      %s43 = int_to_ptr.hbm [resolvable:$true] %s42
      %s44 = sshll.u32 [#allocation7], 4
      %s45 = int_to_ptr.vmem [resolvable:$true] %s44
      %50 = dma.hbm_to_vmem [thread:$0]  %s43, 384, %s45, [#allocation6], 128, 128, 8
    $region13: #{tpu_custom_call.1} parent=1 // pred_fallthru
      _
    // Predicated region
    $region14: #{tpu_custom_call.1} parent=1 // pred_check
      _
    $region15: #{tpu_custom_call.1} parent=1 // pred_check_branch
      %52 = sbr.rel (0) target = $region17
    $region16: #{tpu_custom_call.1} parent=1 // pred_region
      %54 = vsyncadd [#allocation9], 0
      %s55 = sshll.u32 %s3, 4
      %s56 = int_to_ptr.hbm [resolvable:$true] %s55
      %s57 = sshll.u32 [#allocation8], 4
      %s58 = int_to_ptr.vmem [resolvable:$true] %s57
      %63 = dma.hbm_to_vmem [thread:$0]  %s56, 8192, %s58, [#allocation9], 64, 64, 4
    $region17: #{tpu_custom_call.1} parent=1 // pred_fallthru
      _
    // Predicated region
    $region18: #{tpu_custom_call.1} parent=1 // pred_check
      _
    $region19: #{tpu_custom_call.1} parent=1 // pred_check_branch
      %65 = sbr.rel (0) target = $region21
    $region20: #{tpu_custom_call.1} parent=1 // pred_region
      %67 = dma.done [#allocation3], 128
    $region21: #{tpu_custom_call.1} parent=1 // pred_fallthru
      _
    // Predicated region
    $region22: #{tpu_custom_call.1} parent=1 // pred_check
      _
    $region23: #{tpu_custom_call.1} parent=1 // pred_check_branch
      %69 = sbr.rel (0) target = $region25
    $region24: #{tpu_custom_call.1} parent=1 // pred_region
      %71 = dma.done [#allocation6], 32
    $region25: #{tpu_custom_call.1} parent=1 // pred_fallthru
      _
    // Predicated region
    $region26: #{tpu_custom_call.1} parent=1 // pred_check
      _
    $region27: #{tpu_custom_call.1} parent=1 // pred_check_branch
      %73 = sbr.rel (0) target = $region29
    $region28: #{tpu_custom_call.1} parent=1 // pred_region
      %75 = dma.done [#allocation6], 384
    $region29: #{tpu_custom_call.1} parent=1 // pred_fallthru
      _
    // Predicated region
    $region30: #{tpu_custom_call.1} parent=1 // pred_check
      _
    $region31: #{tpu_custom_call.1} parent=1 // pred_check_branch
      %77 = sbr.rel (0) target = $region33
    $region32: #{tpu_custom_call.1} parent=1 // pred_region
      %79 = dma.done [#allocation9], 8192
    $region33: #{tpu_custom_call.1} parent=1 // pred_fallthru
      _
    %v81 = vld [vmem:[#allocation2] sm:$0xff]
    %v82 = vld [vmem:[#allocation5] sm:$0x3]
    %v83 = vperm.slane %v82, 0
    %v84 = vsub.f32 %v81, %v83
    %v85 = vadd.f32 %v82, 0.0001
    %v86 = vrsqrt.pop %v85
    %v87 = vmul.f32 %v86, %v85
    %v88 = vmul.f32 %v87, %v86
    %v89 = vmul.f32 0.5, %v88
    %v90 = vsub.f32 1.5, %v89
    %v91 = vmul.f32 %v86, %v90
    %vm92 = vweird.f32 %v85
    %vm93 = vweird.f32 %v86
    %vm94 = vmor %vm92, %vm93
    %v95 = vsel %vm94, %v86, %v91
    %v96 = vperm.slane %v95, 1
    %v97 = vmul.f32 %v84, %v96
    %v98 = vmax.f32 %v97, -1000.0
    %v99 = vmin.f32 %v98, 1000.0
    %v100 = vld [vmem:[#allocation7] sm:$0xff]
    %v101 = vld [vmem:[#allocation7 + $0x8] sm:$0xff]
    %v102 = vld [vmem:[#allocation7 + $0x10] sm:$0xf]
    %vm103 = vcmask 261120
    %v104 = vsel %vm103, %v99, 0.0
    %105 = vadd.xlane.f32.xlu0 %v104
    %v106 = vpop.xlane.xlu0 %105
    %v107 = vmul.f32 %v106, 0.03125
    %v108 = vsub.f32 %v99, %v107
    %v109 = vmul.f32 %v108, %v108
    %v110 = vsel %vm103, %v109, 0.0
    %111 = vadd.xlane.f32.xlu0 %v110
    %v112 = vpop.xlane.xlu0 %111
    %v113 = vmul.f32 %v112, 0.03125
    %v114 = vadd.f32 %v113, 1e-05
    %v115 = vrsqrt.pop %v114
    %v116 = vmul.f32 %v115, %v114
    %v117 = vmul.f32 %v116, %v115
    %v118 = vmul.f32 0.5, %v117
    %v119 = vsub.f32 1.5, %v118
    %v120 = vmul.f32 %v115, %v119
    %vm121 = vweird.f32 %v114
    %vm122 = vweird.f32 %v115
    %vm123 = vmor %vm121, %vm122
    %v124 = vsel %vm123, %v115, %v120
    %v125 = vmul.f32 %v108, %v124
    %v126 = vperm.slane %v100, 0
    %v127 = vmul.f32 %v125, %v126
    %v128 = vperm.slane %v100, 1
    %v129 = vadd.f32 %v127, %v128
    %v130 = vld [vmem:[#allocation8] sm:$0xf]
    %v131 = vld [vmem:[#allocation8 + $0x4] sm:$0xf]
    %v132 = vld [vmem:[#allocation8 + $0x8] sm:$0xf]
    %v133 = vld [vmem:[#allocation8 + $0xc] sm:$0xf]
    %v134 = vpack.c.bf16 %v129, %v129
    %v135 = vperm.slane %v100, 2
    %v140 = vunpack.c.l.b16 %v130
    %v141 = vunpack.c.l.b16 %v131
    %v142 = vunpack.c.l.b16 %v132
    %v143 = vunpack.c.l.b16 %v133
    %v144 = vpack.c.b16 %v141, %v140
    %v145 = vpack.c.b16 %v143, %v142
    %v149 = vsel %vm103, %v134, 0
    %151 = vmatpush.bf16.msra.mxu0 0
    %152 = vmatpush.bf16.msra.mxu0 0
    %153 = vmatpush.bf16.msra.mxu0 0
    %154 = vmatpush.bf16.msra.mxu0 0
    %155 = vmatpush.bf16.msra.mxu0 0
    %156 = vmatpush.bf16.msra.mxu0 0
    %157 = vmatpush.bf16.msra.mxu0 %v145
    %158 = vmatpush.bf16.msra.mxu0 %v144
    %159 = vmatmul.bf16.gmra.mxu0 %v149
    %v160 = vpop.f32.mrf.mxu0
    %v161 = vadd.f32 %v135, %v160
    %v162 = vpop.f32.mrf.mxu0
    %163 = vdwg.mxu0
    %v164 = vmax.f32 %v161, 0.0
    %v165 = vld [vmem:[#allocation8 + $0x40] sm:$0xf]
    %v166 = vld [vmem:[#allocation8 + $0x44] sm:$0xf]
    %v167 = vld [vmem:[#allocation8 + $0x48] sm:$0xf]
    %v168 = vld [vmem:[#allocation8 + $0x4c] sm:$0xf]
    %v169 = vld [vmem:[#allocation8 + $0x50] sm:$0xf]
    %v170 = vld [vmem:[#allocation8 + $0x54] sm:$0xf]
    %v171 = vld [vmem:[#allocation8 + $0x58] sm:$0xf]
    %v172 = vld [vmem:[#allocation8 + $0x5c] sm:$0xf]
    %v173 = vld [vmem:[#allocation8 + $0x60] sm:$0xf]
    %v174 = vld [vmem:[#allocation8 + $0x64] sm:$0xf]
    %v175 = vld [vmem:[#allocation8 + $0x68] sm:$0xf]
    %v176 = vld [vmem:[#allocation8 + $0x6c] sm:$0xf]
    %v177 = vld [vmem:[#allocation8 + $0x70] sm:$0xf]
    %v178 = vld [vmem:[#allocation8 + $0x74] sm:$0xf]
    %v179 = vld [vmem:[#allocation8 + $0x78] sm:$0xf]
    %v180 = vld [vmem:[#allocation8 + $0x7c] sm:$0xf]
    %v181 = vpack.c.bf16 %v164, %v164
    %v182 = vperm.slane %v100, 3
    %v199 = vunpack.c.l.b16 %v165
    %v200 = vunpack.c.l.b16 %v166
    %v201 = vunpack.c.l.b16 %v167
    %v202 = vunpack.c.l.b16 %v168
    %v203 = vunpack.c.l.b16 %v169
    %v204 = vunpack.c.l.b16 %v170
    %v205 = vunpack.c.l.b16 %v171
    %v206 = vunpack.c.l.b16 %v172
    %v207 = vunpack.c.l.b16 %v173
    %v208 = vunpack.c.l.b16 %v174
    %v209 = vunpack.c.l.b16 %v175
    %v210 = vunpack.c.l.b16 %v176
    %v211 = vunpack.c.l.b16 %v177
    %v212 = vunpack.c.l.b16 %v178
    %v213 = vunpack.c.l.b16 %v179
    %v214 = vunpack.c.l.b16 %v180
    %v215 = vpack.c.b16 %v200, %v199
    %v216 = vpack.c.b16 %v202, %v201
    %v217 = vpack.c.b16 %v204, %v203
    %v218 = vpack.c.b16 %v206, %v205
    %v219 = vpack.c.b16 %v208, %v207
    %v220 = vpack.c.b16 %v210, %v209
    %v221 = vpack.c.b16 %v212, %v211
    %v222 = vpack.c.b16 %v214, %v213
    %231 = vmatpush.bf16.msra.mxu0 %v222
    %232 = vmatpush.bf16.msra.mxu0 %v221
    %233 = vmatpush.bf16.msra.mxu0 %v220
    %234 = vmatpush.bf16.msra.mxu0 %v219
    %235 = vmatpush.bf16.msra.mxu0 %v218
    %236 = vmatpush.bf16.msra.mxu0 %v217
    %237 = vmatpush.bf16.msra.mxu0 %v216
    %238 = vmatpush.bf16.msra.mxu0 %v215
    %239 = vmatmul.bf16.gmra.mxu0 %v181
    %v240 = vpop.f32.mrf.mxu0
    %v241 = vadd.f32 %v182, %v240
    %v242 = vpop.f32.mrf.mxu0
    %243 = vdwg.mxu0
    %vm244 = vcmask 523264
    %v245 = vsel %vm244, %v241, 0.0
    %246 = vadd.xlane.f32.xlu0 %v245
    %v247 = vpop.xlane.xlu0 %246
    %v248 = vmul.f32 %v247, 0.015625
    %v249 = vsub.f32 %v241, %v248
    %v250 = vmul.f32 %v249, %v249
    %v251 = vsel %vm244, %v250, 0.0
    %252 = vadd.xlane.f32.xlu0 %v251
    %v253 = vpop.xlane.xlu0 %252
    %v254 = vmul.f32 %v253, 0.015625
    %v255 = vadd.f32 %v254, 1e-05
    %v256 = vrsqrt.pop %v255
    %v257 = vmul.f32 %v256, %v255
    %v258 = vmul.f32 %v257, %v256
    %v259 = vmul.f32 0.5, %v258
    %v260 = vsub.f32 1.5, %v259
    %v261 = vmul.f32 %v256, %v260
    %vm262 = vweird.f32 %v255
    %vm263 = vweird.f32 %v256
    %vm264 = vmor %vm262, %vm263
    %v265 = vsel %vm264, %v256, %v261
    %v266 = vmul.f32 %v249, %v265
    %v267 = vperm.slane %v100, 4
    %v268 = vmul.f32 %v266, %v267
    %v269 = vperm.slane %v100, 5
    %v270 = vadd.f32 %v268, %v269
    %v271 = vmax.f32 %v270, 0.0
    %v272 = vld [vmem:[#allocation8 + $0x80] sm:$0xf]
    %v273 = vld [vmem:[#allocation8 + $0x84] sm:$0xf]
    %v274 = vld [vmem:[#allocation8 + $0x88] sm:$0xf]
    %v275 = vld [vmem:[#allocation8 + $0x8c] sm:$0xf]
    %v276 = vld [vmem:[#allocation8 + $0x90] sm:$0xf]
    %v277 = vld [vmem:[#allocation8 + $0x94] sm:$0xf]
    %v278 = vld [vmem:[#allocation8 + $0x98] sm:$0xf]
    %v279 = vld [vmem:[#allocation8 + $0x9c] sm:$0xf]
    %v280 = vpack.c.bf16 %v271, %v271
    %v281 = vperm.slane %v100, 6
    %v290 = vunpack.c.l.b16 %v272
    %v291 = vunpack.c.l.b16 %v273
    %v292 = vunpack.c.l.b16 %v274
    %v293 = vunpack.c.l.b16 %v275
    %v294 = vunpack.c.l.b16 %v276
    %v295 = vunpack.c.l.b16 %v277
    %v296 = vunpack.c.l.b16 %v278
    %v297 = vunpack.c.l.b16 %v279
    %v298 = vpack.c.b16 %v291, %v290
    %v299 = vpack.c.b16 %v293, %v292
    %v300 = vpack.c.b16 %v295, %v294
    %v301 = vpack.c.b16 %v297, %v296
    %v307 = vsel %vm244, %v280, 0
    %309 = vmatpush.bf16.msra.mxu0 0
    %310 = vmatpush.bf16.msra.mxu0 0
    %311 = vmatpush.bf16.msra.mxu0 0
    %312 = vmatpush.bf16.msra.mxu0 0
    %313 = vmatpush.bf16.msra.mxu0 %v301
    %314 = vmatpush.bf16.msra.mxu0 %v300
    %315 = vmatpush.bf16.msra.mxu0 %v299
    %316 = vmatpush.bf16.msra.mxu0 %v298
    %317 = vmatmul.bf16.gmra.mxu0 %v307
    %v318 = vpop.f32.mrf.mxu0
    %v319 = vadd.f32 %v281, %v318
    %v320 = vpop.f32.mrf.mxu0
    %321 = vdwg.mxu0
    %v322 = vadd.f32 %v270, %v319
    %v323 = vsel %vm244, %v322, 0.0
    %324 = vadd.xlane.f32.xlu0 %v323
    %v325 = vpop.xlane.xlu0 %324
    %v326 = vmul.f32 %v325, 0.015625
    %v327 = vsub.f32 %v322, %v326
    %v328 = vmul.f32 %v327, %v327
    %v329 = vsel %vm244, %v328, 0.0
    %330 = vadd.xlane.f32.xlu0 %v329
    %v331 = vpop.xlane.xlu0 %330
    %v332 = vmul.f32 %v331, 0.015625
    %v333 = vadd.f32 %v332, 1e-05
    %v334 = vrsqrt.pop %v333
    %v335 = vmul.f32 %v334, %v333
    %v336 = vmul.f32 %v335, %v334
    %v337 = vmul.f32 0.5, %v336
    %v338 = vsub.f32 1.5, %v337
    %v339 = vmul.f32 %v334, %v338
    %vm340 = vweird.f32 %v333
    %vm341 = vweird.f32 %v334
    %vm342 = vmor %vm340, %vm341
    %v343 = vsel %vm342, %v334, %v339
    %v344 = vmul.f32 %v327, %v343
    %v345 = vperm.slane %v100, 7
    %v346 = vmul.f32 %v344, %v345
    %v347 = vperm.slane %v101, 0
    %v348 = vadd.f32 %v346, %v347
    %v349 = vmax.f32 %v348, 0.0
    %v350 = vld [vmem:[#allocation8 + $0xc0] sm:$0xf]
    %v351 = vld [vmem:[#allocation8 + $0xc4] sm:$0xf]
    %v352 = vld [vmem:[#allocation8 + $0xc8] sm:$0xf]
    %v353 = vld [vmem:[#allocation8 + $0xcc] sm:$0xf]
    %v354 = vld [vmem:[#allocation8 + $0xd0] sm:$0xf]
    %v355 = vld [vmem:[#allocation8 + $0xd4] sm:$0xf]
    %v356 = vld [vmem:[#allocation8 + $0xd8] sm:$0xf]
    %v357 = vld [vmem:[#allocation8 + $0xdc] sm:$0xf]
    %v358 = vpack.c.bf16 %v349, %v349
    %v359 = vperm.slane %v101, 1
    %v368 = vunpack.c.l.b16 %v350
    %v369 = vunpack.c.l.b16 %v351
    %v370 = vunpack.c.l.b16 %v352
    %v371 = vunpack.c.l.b16 %v353
    %v372 = vunpack.c.l.b16 %v354
    %v373 = vunpack.c.l.b16 %v355
    %v374 = vunpack.c.l.b16 %v356
    %v375 = vunpack.c.l.b16 %v357
    %v376 = vpack.c.b16 %v369, %v368
    %v377 = vpack.c.b16 %v371, %v370
    %v378 = vpack.c.b16 %v373, %v372
    %v379 = vpack.c.b16 %v375, %v374
    %v385 = vsel %vm244, %v358, 0
    %387 = vmatpush.bf16.msra.mxu0 0
    %388 = vmatpush.bf16.msra.mxu0 0
    %389 = vmatpush.bf16.msra.mxu0 0
    %390 = vmatpush.bf16.msra.mxu0 0
    %391 = vmatpush.bf16.msra.mxu0 %v379
    %392 = vmatpush.bf16.msra.mxu0 %v378
    %393 = vmatpush.bf16.msra.mxu0 %v377
    %394 = vmatpush.bf16.msra.mxu0 %v376
    %395 = vmatmul.bf16.gmra.mxu0 %v385
    %v396 = vpop.f32.mrf.mxu0
    %v397 = vadd.f32 %v359, %v396
    %v398 = vpop.f32.mrf.mxu0
    %399 = vdwg.mxu0
    %v400 = vtanh.pop %v397
    %401 = vst [vmem:[#allocation10] sm:$0xff] %v400
    %vm402 = vcmask 130048
    %v403 = vsel %vm402, %v400, 0.0
    %404 = vadd.xlane.f32.xlu0 %v403
    %v405 = vpop.xlane.xlu0 %404
    %v406 = vmul.f32 %v405, 0.0625
    %v407 = vsub.f32 %v400, %v406
    %v408 = vmul.f32 %v407, %v407
    %v409 = vsel %vm402, %v408, 0.0
    %410 = vadd.xlane.f32.xlu0 %v409
    %v411 = vpop.xlane.xlu0 %410
    %v412 = vmul.f32 %v411, 0.0625
    %v413 = vadd.f32 %v412, 1e-05
    %v414 = vrsqrt.pop %v413
    %v415 = vmul.f32 %v414, %v413
    %v416 = vmul.f32 %v415, %v414
    %v417 = vmul.f32 0.5, %v416
    %v418 = vsub.f32 1.5, %v417
    %v419 = vmul.f32 %v414, %v418
    %vm420 = vweird.f32 %v413
    %vm421 = vweird.f32 %v414
    %vm422 = vmor %vm420, %vm421
    %v423 = vsel %vm422, %v414, %v419
    %v424 = vmul.f32 %v407, %v423
    %v425 = vperm.slane %v101, 2
    %v426 = vmul.f32 %v424, %v425
    %v427 = vperm.slane %v101, 3
    %v428 = vadd.f32 %v426, %v427
    %v429 = vld [vmem:[#allocation8 + $0x100] sm:$0xf]
    %v430 = vld [vmem:[#allocation8 + $0x104] sm:$0xf]
    %v431 = vpack.c.bf16 %v428, %v428
    %v432 = vperm.slane %v101, 4
    %v435 = vunpack.c.l.b16 %v429
    %v436 = vunpack.c.l.b16 %v430
    %v437 = vpack.c.b16 %v436, %v435
    %v440 = vsel %vm402, %v431, 0
    %442 = vmatpush.bf16.msra.mxu0 0
    %443 = vmatpush.bf16.msra.mxu0 0
    %444 = vmatpush.bf16.msra.mxu0 0
    %445 = vmatpush.bf16.msra.mxu0 0
    %446 = vmatpush.bf16.msra.mxu0 0
    %447 = vmatpush.bf16.msra.mxu0 0
    %448 = vmatpush.bf16.msra.mxu0 0
    %449 = vmatpush.bf16.msra.mxu0 %v437
    %450 = vmatmul.bf16.gmra.mxu0 %v440
    %v451 = vpop.f32.mrf.mxu0
    %v452 = vadd.f32 %v432, %v451
    %v453 = vpop.f32.mrf.mxu0
    %454 = vdwg.mxu0
    %v455 = vmax.f32 %v452, 0.0
    %v456 = vld [vmem:[#allocation8 + $0x140] sm:$0xf]
    %v457 = vld [vmem:[#allocation8 + $0x144] sm:$0xf]
    %v458 = vld [vmem:[#allocation8 + $0x148] sm:$0xf]
    %v459 = vld [vmem:[#allocation8 + $0x14c] sm:$0xf]
    %v460 = vld [vmem:[#allocation8 + $0x150] sm:$0xf]
    %v461 = vld [vmem:[#allocation8 + $0x154] sm:$0xf]
    %v462 = vld [vmem:[#allocation8 + $0x158] sm:$0xf]
    %v463 = vld [vmem:[#allocation8 + $0x15c] sm:$0xf]
    %v464 = vld [vmem:[#allocation8 + $0x160] sm:$0xf]
    %v465 = vld [vmem:[#allocation8 + $0x164] sm:$0xf]
    %v466 = vld [vmem:[#allocation8 + $0x168] sm:$0xf]
    %v467 = vld [vmem:[#allocation8 + $0x16c] sm:$0xf]
    %v468 = vld [vmem:[#allocation8 + $0x170] sm:$0xf]
    %v469 = vld [vmem:[#allocation8 + $0x174] sm:$0xf]
    %v470 = vld [vmem:[#allocation8 + $0x178] sm:$0xf]
    %v471 = vld [vmem:[#allocation8 + $0x17c] sm:$0xf]
    %v472 = vpack.c.bf16 %v455, %v455
    %v473 = vperm.slane %v101, 5
    %v490 = vunpack.c.l.b16 %v456
    %v491 = vunpack.c.l.b16 %v457
    %v492 = vunpack.c.l.b16 %v458
    %v493 = vunpack.c.l.b16 %v459
    %v494 = vunpack.c.l.b16 %v460
    %v495 = vunpack.c.l.b16 %v461
    %v496 = vunpack.c.l.b16 %v462
    %v497 = vunpack.c.l.b16 %v463
    %v498 = vunpack.c.l.b16 %v464
    %v499 = vunpack.c.l.b16 %v465
    %v500 = vunpack.c.l.b16 %v466
    %v501 = vunpack.c.l.b16 %v467
    %v502 = vunpack.c.l.b16 %v468
    %v503 = vunpack.c.l.b16 %v469
    %v504 = vunpack.c.l.b16 %v470
    %v505 = vunpack.c.l.b16 %v471
    %v506 = vpack.c.b16 %v491, %v490
    %v507 = vpack.c.b16 %v493, %v492
    %v508 = vpack.c.b16 %v495, %v494
    %v509 = vpack.c.b16 %v497, %v496
    %v510 = vpack.c.b16 %v499, %v498
    %v511 = vpack.c.b16 %v501, %v500
    %v512 = vpack.c.b16 %v503, %v502
    %v513 = vpack.c.b16 %v505, %v504
    %522 = vmatpush.bf16.msra.mxu0 %v513
    %523 = vmatpush.bf16.msra.mxu0 %v512
    %524 = vmatpush.bf16.msra.mxu0 %v511
    %525 = vmatpush.bf16.msra.mxu0 %v510
    %526 = vmatpush.bf16.msra.mxu0 %v509
    %527 = vmatpush.bf16.msra.mxu0 %v508
    %528 = vmatpush.bf16.msra.mxu0 %v507
    %529 = vmatpush.bf16.msra.mxu0 %v506
    %530 = vmatmul.bf16.gmra.mxu0 %v472
    %v531 = vpop.f32.mrf.mxu0
    %v532 = vadd.f32 %v473, %v531
    %v533 = vpop.f32.mrf.mxu0
    %534 = vdwg.mxu0
    %v535 = vsel %vm244, %v532, 0.0
    %536 = vadd.xlane.f32.xlu0 %v535
    %v537 = vpop.xlane.xlu0 %536
    %v538 = vmul.f32 %v537, 0.015625
    %v539 = vsub.f32 %v532, %v538
    %v540 = vmul.f32 %v539, %v539
    %v541 = vsel %vm244, %v540, 0.0
    %542 = vadd.xlane.f32.xlu0 %v541
    %v543 = vpop.xlane.xlu0 %542
    %v544 = vmul.f32 %v543, 0.015625
    %v545 = vadd.f32 %v544, 1e-05
    %v546 = vrsqrt.pop %v545
    %v547 = vmul.f32 %v546, %v545
    %v548 = vmul.f32 %v547, %v546
    %v549 = vmul.f32 0.5, %v548
    %v550 = vsub.f32 1.5, %v549
    %v551 = vmul.f32 %v546, %v550
    %vm552 = vweird.f32 %v545
    %vm553 = vweird.f32 %v546
    %vm554 = vmor %vm552, %vm553
    %v555 = vsel %vm554, %v546, %v551
    %v556 = vmul.f32 %v539, %v555
    %v557 = vperm.slane %v101, 6
    %v558 = vmul.f32 %v556, %v557
    %v559 = vperm.slane %v101, 7
    %v560 = vadd.f32 %v558, %v559
    %v561 = vmax.f32 %v560, 0.0
    %v562 = vld [vmem:[#allocation8 + $0x180] sm:$0xf]
    %v563 = vld [vmem:[#allocation8 + $0x184] sm:$0xf]
    %v564 = vld [vmem:[#allocation8 + $0x188] sm:$0xf]
    %v565 = vld [vmem:[#allocation8 + $0x18c] sm:$0xf]
    %v566 = vld [vmem:[#allocation8 + $0x190] sm:$0xf]
    %v567 = vld [vmem:[#allocation8 + $0x194] sm:$0xf]
    %v568 = vld [vmem:[#allocation8 + $0x198] sm:$0xf]
    %v569 = vld [vmem:[#allocation8 + $0x19c] sm:$0xf]
    %v570 = vpack.c.bf16 %v561, %v561
    %v571 = vperm.slane %v102, 0
    %v580 = vunpack.c.l.b16 %v562
    %v581 = vunpack.c.l.b16 %v563
    %v582 = vunpack.c.l.b16 %v564
    %v583 = vunpack.c.l.b16 %v565
    %v584 = vunpack.c.l.b16 %v566
    %v585 = vunpack.c.l.b16 %v567
    %v586 = vunpack.c.l.b16 %v568
    %v587 = vunpack.c.l.b16 %v569
    %v588 = vpack.c.b16 %v581, %v580
    %v589 = vpack.c.b16 %v583, %v582
    %v590 = vpack.c.b16 %v585, %v584
    %v591 = vpack.c.b16 %v587, %v586
    %v597 = vsel %vm244, %v570, 0
    %599 = vmatpush.bf16.msra.mxu0 0
    %600 = vmatpush.bf16.msra.mxu0 0
    %601 = vmatpush.bf16.msra.mxu0 0
    %602 = vmatpush.bf16.msra.mxu0 0
    %603 = vmatpush.bf16.msra.mxu0 %v591
    %604 = vmatpush.bf16.msra.mxu0 %v590
    %605 = vmatpush.bf16.msra.mxu0 %v589
    %606 = vmatpush.bf16.msra.mxu0 %v588
    %607 = vmatmul.bf16.gmra.mxu0 %v597
    %v608 = vpop.f32.mrf.mxu0
    %v609 = vadd.f32 %v571, %v608
    %v610 = vpop.f32.mrf.mxu0
    %611 = vdwg.mxu0
    %v612 = vadd.f32 %v560, %v609
    %v613 = vsel %vm244, %v612, 0.0
    %614 = vadd.xlane.f32.xlu0 %v613
    %v615 = vpop.xlane.xlu0 %614
    %v616 = vmul.f32 %v615, 0.015625
    %v617 = vsub.f32 %v612, %v616
    %v618 = vmul.f32 %v617, %v617
    %v619 = vsel %vm244, %v618, 0.0
    %620 = vadd.xlane.f32.xlu0 %v619
    %v621 = vpop.xlane.xlu0 %620
    %v622 = vmul.f32 %v621, 0.015625
    %v623 = vadd.f32 %v622, 1e-05
    %v624 = vrsqrt.pop %v623
    %v625 = vmul.f32 %v624, %v623
    %v626 = vmul.f32 %v625, %v624
    %v627 = vmul.f32 0.5, %v626
    %v628 = vsub.f32 1.5, %v627
    %v629 = vmul.f32 %v624, %v628
    %vm630 = vweird.f32 %v623
    %vm631 = vweird.f32 %v624
    %vm632 = vmor %vm630, %vm631
    %v633 = vsel %vm632, %v624, %v629
    %v634 = vmul.f32 %v617, %v633
    %v635 = vperm.slane %v102, 1
    %v636 = vmul.f32 %v634, %v635
    %v637 = vperm.slane %v102, 2
    %v638 = vadd.f32 %v636, %v637
    %v639 = vmax.f32 %v638, 0.0
    %v640 = vld [vmem:[#allocation8 + $0x1c0] sm:$0xf]
    %v641 = vld [vmem:[#allocation8 + $0x1c4] sm:$0xf]
    %v642 = vld [vmem:[#allocation8 + $0x1c8] sm:$0xf]
    %v643 = vld [vmem:[#allocation8 + $0x1cc] sm:$0xf]
    %v644 = vld [vmem:[#allocation8 + $0x1d0] sm:$0xf]
    %v645 = vld [vmem:[#allocation8 + $0x1d4] sm:$0xf]
    %v646 = vld [vmem:[#allocation8 + $0x1d8] sm:$0xf]
    %v647 = vld [vmem:[#allocation8 + $0x1dc] sm:$0xf]
    %v648 = vpack.c.bf16 %v639, %v639
    %v649 = vperm.slane %v102, 3
    %v658 = vunpack.c.l.b16 %v640
    %v659 = vunpack.c.l.b16 %v641
    %v660 = vunpack.c.l.b16 %v642
    %v661 = vunpack.c.l.b16 %v643
    %v662 = vunpack.c.l.b16 %v644
    %v663 = vunpack.c.l.b16 %v645
    %v664 = vunpack.c.l.b16 %v646
    %v665 = vunpack.c.l.b16 %v647
    %v666 = vpack.c.b16 %v659, %v658
    %v667 = vpack.c.b16 %v661, %v660
    %v668 = vpack.c.b16 %v663, %v662
    %v669 = vpack.c.b16 %v665, %v664
    %v675 = vsel %vm244, %v648, 0
    %677 = vmatpush.bf16.msra.mxu0 0
    %678 = vmatpush.bf16.msra.mxu0 0
    %679 = vmatpush.bf16.msra.mxu0 0
    %680 = vmatpush.bf16.msra.mxu0 0
    %681 = vmatpush.bf16.msra.mxu0 %v669
    %682 = vmatpush.bf16.msra.mxu0 %v668
    %683 = vmatpush.bf16.msra.mxu0 %v667
    %684 = vmatpush.bf16.msra.mxu0 %v666
    %685 = vmatmul.bf16.gmra.mxu0 %v675
    %v686 = vpop.f32.mrf.mxu0
    %v687 = vadd.f32 %v649, %v686
    %v688 = vpop.f32.mrf.mxu0
    %689 = vdwg.mxu0
    %690 = vst [vmem:[#allocation11] sm:$0xff] %v687
    // Predicated region
    $region34: #{tpu_custom_call.1} parent=1 // pred_check
      _
    $region35: #{tpu_custom_call.1} parent=1 // pred_check_branch
      %692 = sbr.rel (0) target = $region37
    $region36: #{tpu_custom_call.1} parent=1 // pred_region
      %694 = vsyncadd [#allocation4], 0
      %s696 = sshll.u32 [#allocation10], 4
      %s697 = int_to_ptr.vmem [resolvable:$true] %s696
      %s698 = sshll.u32 %s4, 4
      %s699 = int_to_ptr.hbm [resolvable:$true] %s698
      %701 = dma.vmem_to_hbm [thread:$0]  %s697, 128, %s699, [#allocation4]
    $region37: #{tpu_custom_call.1} parent=1 // pred_fallthru
      _
    // Predicated region
    $region38: #{tpu_custom_call.1} parent=1 // pred_check
      _
    $region39: #{tpu_custom_call.1} parent=1 // pred_check_branch
      %703 = sbr.rel (0) target = $region41
    $region40: #{tpu_custom_call.1} parent=1 // pred_region
      %705 = vsyncadd [#allocation12], 0
      %s707 = sshll.u32 [#allocation11], 4
      %s708 = int_to_ptr.vmem [resolvable:$true] %s707
      %s709 = sshll.u32 %s5, 4
      %s710 = int_to_ptr.hbm [resolvable:$true] %s709
      %712 = dma.vmem_to_hbm [thread:$0]  %s708, 128, %s710, [#allocation12]
    $region41: #{tpu_custom_call.1} parent=1 // pred_fallthru
      _
    // Predicated region
    $region42: #{tpu_custom_call.1} parent=1 // pred_check
      _
    $region43: #{tpu_custom_call.1} parent=1 // pred_check_branch
      %714 = sbr.rel (0) target = $region45
    $region44: #{tpu_custom_call.1} parent=1 // pred_region
      %716 = dma.done [#allocation4], 128
    $region45: #{tpu_custom_call.1} parent=1 // pred_fallthru
      _
    // Predicated region
    $region46: #{tpu_custom_call.1} parent=1 // pred_check
      _
    $region47: #{tpu_custom_call.1} parent=1 // pred_check_branch
      %718 = sbr.rel (0) target = $region49
    $region48: #{tpu_custom_call.1} parent=1 // pred_region
      %720 = dma.done [#allocation12], 128
    $region49: #{tpu_custom_call.1} parent=1 // pred_fallthru
      _
    %721 = vsyncpa [#allocation3], 1
    %722 = vsyncpa [#allocation6], 1
    %723 = vsyncpa [#allocation9], 1
    %724 = vsyncpa [#allocation4], 1
    %725 = vsyncpa [#allocation12], 1

</llo_original>
